<compile_context>
chip_gen: v5e
topology: v5e:2x2
jax: 0.10.0
libtpu: 0.0.40
codegen_flags: <defaults>
</compile_context>

<pallas_src>
import jax
import jax.numpy as jnp
from jax import lax
from jax.experimental import pallas as pl
from jax.experimental.pallas import tpu as pltpu

_MIB = 1024 * 1024


def _round_up(x, m):
    return (x + m - 1) // m * m


# --------------------------------------------------------------------------- #
# Kernel: one (TQ x N) slab of the attention map + the matching output columns.
# --------------------------------------------------------------------------- #
def _attn_core_kernel(q_ref, k_ref, v_ref, x_ref, gamma_ref, out_ref, attn_ref):
    # q_ref:  (1, TQ, C8P)   query rows for this tile (bias already added)
    # k_ref:  (1, C8P, N)    keys for the whole image (cached across q tiles)
    # v_ref:  (1, C,   N)    values for the whole image
    # x_ref:  (1, C,  TQ)    residual input tile (channel-major)
    # out:    (1, C,  TQ)    gamma * (V @ att^T) + x
    # attn:   (1, TQ,  N)    softmax(energy) rows
    q = q_ref[0]                                                    # (TQ, C8P)
    k = k_ref[0]                                                    # (C8P, N)

    # energy[i, j] = <q_i, k_j>  (MXU NN matmul; padded channels contribute 0).
    energy = lax.dot_general(q, k, (((1,), (0,)), ((), ())),
                             preferred_element_type=jnp.float32)    # (TQ, N) f32

    # Exact, numerically-stable softmax over the key axis (all N keys visible).
    m = jnp.max(energy, axis=-1, keepdims=True)
    e = jnp.exp(energy - m)
    s = jnp.sum(e, axis=-1, keepdims=True)
    att = e / s                                                     # (TQ, N) f32

    attn_ref[0] = att.astype(attn_ref.dtype)

    # out[c, i] = sum_j v[c, j] * att[i, j]   (torch bmm orientation, NT matmul)
    attn_v = lax.dot_general(v_ref[0], att.astype(v_ref.dtype),
                             (((1,), (1,)), ((), ())),
                             preferred_element_type=jnp.float32)    # (C, TQ) f32

    out_ref[0] = (gamma_ref[0] * attn_v
                  + x_ref[0].astype(jnp.float32)).astype(out_ref.dtype)


# --------------------------------------------------------------------------- #
# VMEM budgeting.
# --------------------------------------------------------------------------- #
def _vmem_capacity_bytes():
    try:
        return int(pltpu.get_tpu_info().vmem_capacity_bytes)
    except Exception:
        return 64 * _MIB        # v7x-safe fallback (smallest VMEM of current gens)


def _vmem_limits():
    cap = _vmem_capacity_bytes()
    if cap <= 64 * _MIB:
        # v7x-class parts: leave ~12 MiB headroom for Mosaic internal scratch.
        hard_cap = max(16 * _MIB, min(cap - 12 * _MIB, int(cap * 0.85)))
    else:
        hard_cap = int(cap * 0.9)
    tile_budget = min(hard_cap, int(cap * 0.75))
    return hard_cap, tile_budget


def _vmem_estimate_bytes(C, N, tq, c8p, cbytes, attn_bytes):
    est = 0
    est += 2 * tq * c8p * cbytes                       # Q tile (double-buffered)
    est += 2 * c8p * N * cbytes                        # K block
    est += 2 * C * N * cbytes                          # V block
    est += 2 * C * tq * 4                              # x residual tile (f32)
    est += 2 * C * tq * 4                              # out block
    est += 2 * tq * N * attn_bytes                     # attention out block
    est += 3 * tq * N * 4 + tq * N * attn_bytes        # energy / exp / att temps
    est += 2 * C * tq * 4 + 256 * 1024                 # attn_v temp + slack
    return est


def _pick_tq(N, C, c8p, cbytes, attn_bytes, budget):
    """Largest query-tile (multiple of 128, or N) whose working set fits budget."""
    candidates = [N]
    if N % 128 == 0:
        candidates += [t for t in (2048, 1024, 512, 256, 128) if t < N and N % t == 0]
    for tq in candidates:
        if _vmem_estimate_bytes(C, N, tq, c8p, cbytes, attn_bytes) <= budget:
            return tq
    # TODO(synk): key-axis tiling when even the smallest legal tile busts the budget.
    return candidates[-1]


# --------------------------------------------------------------------------- #
# Wrapper: matches torch Self_Attn.forward -> (out NCHW, attention (B, N, N)).
# --------------------------------------------------------------------------- #
def self_attn_forward(x_nchw, wq, bq, wk, bk, wv, bv, gamma, *,
                      compute_dtype=jnp.float32,     # f32 = torch-accurate; bf16 opt-in on TPU
                      attn_dtype=jnp.bfloat16):      # bf16 attention halves HBM writeback
    """x_nchw: (B, C, W, H) f32.  Torch Conv2d(k=1) params:
       wq/wk: (C//8, C, 1, 1), wv: (C, C, 1, 1), 1-D biases, gamma: (1,)."""
    B, C, W, H = x_nchw.shape
    N = W * H
    C8 = wq.shape[0]

    cbytes = jnp.dtype(compute_dtype).itemsize
    attn_bytes = jnp.dtype(attn_dtype).itemsize
    sublane = 16 if cbytes == 2 else 8
    c8p = _round_up(C8, sublane)       # pad contraction depth only to sublane minimum

    hard_cap, tile_budget = _vmem_limits()
    tq = _pick_tq(N, C, c8p, cbytes, attn_bytes, budget=tile_budget)
    num_q = N // tq
    est = _vmem_estimate_bytes(C, N, tq, c8p, cbytes, attn_bytes)
    vmem_limit = int(min(hard_cap, max(32 * _MIB, int(est * 1.5))))

    # NCHW -> (B, C, N): pure reshape (same layout torch uses for value / output).
    x_cn = x_nchw.reshape(B, C, N).astype(jnp.float32)

    # Hoisted 1x1-conv projections (O(C^2*N) XLA GEMMs; negligible vs O(N^2*C)
    # attention).  Q comes out directly in (B, N, C8) so the kernel needs no
    # transposes; zero-padding of the C8 channels contributes exact zeros.
    wq2 = wq.reshape(C8, C).astype(jnp.float32)
    wk2 = wk.reshape(C8, C).astype(jnp.float32)
    wv2 = wv.reshape(C, C).astype(jnp.float32)
    q_t = jnp.einsum('oc,bcn->bno', wq2, x_cn) + bq.astype(jnp.float32)[None, None, :]
    k = jnp.einsum('oc,bcn->bon', wk2, x_cn) + bk.astype(jnp.float32)[None, :, None]
    v = jnp.einsum('oc,bcn->bon', wv2, x_cn) + bv.astype(jnp.float32)[None, :, None]
    q_t = jnp.pad(q_t, ((0, 0), (0, 0), (0, c8p - C8))).astype(compute_dtype)   # (B, N, C8P)
    k = jnp.pad(k, ((0, 0), (0, c8p - C8), (0, 0))).astype(compute_dtype)       # (B, C8P, N)
    v = v.astype(compute_dtype)                                                  # (B, C, N)
    gamma1 = gamma.reshape(1).astype(jnp.float32)

    out_cn, attn = pl.pallas_call(
        _attn_core_kernel,
        out_shape=(
            jax.ShapeDtypeStruct((B, C, N), x_nchw.dtype),
            jax.ShapeDtypeStruct((B, N, N), attn_dtype),
        ),
        grid_spec=pltpu.PrefetchScalarGridSpec(
            num_scalar_prefetch=0,
            grid=(B, num_q),
            in_specs=[
                pl.BlockSpec((1, tq, c8p), lambda b, q: (b, q, 0)),   # Q tile
                pl.BlockSpec((1, c8p, N), lambda b, q: (b, 0, 0)),    # K (per image)
                pl.BlockSpec((1, C, N), lambda b, q: (b, 0, 0)),      # V (per image)
                pl.BlockSpec((1, C, tq), lambda b, q: (b, 0, q)),     # x residual tile
                pl.BlockSpec(memory_space=pltpu.MemorySpace.SMEM),    # gamma
            ],
            out_specs=[
                pl.BlockSpec((1, C, tq), lambda b, q: (b, 0, q)),     # out (B, C, N)
                pl.BlockSpec((1, tq, N), lambda b, q: (b, q, 0)),     # attention
            ],
        ),
        compiler_params=pltpu.CompilerParams(
            # K/V are plain per-batch inputs now (no scratch dependency), so the
            # query axis is parallel too -> both v7x TensorCores stay busy at B=1.
            dimension_semantics=("parallel", "parallel"),
            vmem_limit_bytes=vmem_limit,
        ),
    )(q_t, k, v, x_cn, gamma1)

    # (B, C, N) -> (B, C, W, H): pure reshape.
    return out_cn.reshape(B, C, W, H), attn


if __name__ == "__main__":
    B, C, W, H = 2, 32, 8, 8
    N = W * H
    C8 = C // 8

    key = jax.random.PRNGKey(0)
    kx, kq, kk, kv, kbq, kbk, kbv = jax.random.split(key, 7)

    x = jax.random.normal(kx, (B, C, W, H), dtype=jnp.float32)
    wq = jax.random.normal(kq, (C8, C, 1, 1), dtype=jnp.float32) * 0.1
    wk = jax.random.normal(kk, (C8, C, 1, 1), dtype=jnp.float32) * 0.1
    wv = jax.random.normal(kv, (C, C, 1, 1), dtype=jnp.float32) * 0.1
    bq = jax.random.normal(kbq, (C8,), dtype=jnp.float32) * 0.1
    bk = jax.random.normal(kbk, (C8,), dtype=jnp.float32) * 0.1
    bv = jax.random.normal(kbv, (C,), dtype=jnp.float32) * 0.1
    gamma0 = jnp.zeros((1,), dtype=jnp.float32)        # torch init: gamma = 0

    out, attn = self_attn_forward(x, wq, bq, wk, bk, wv, bv, gamma0)
    jax.block_until_ready((out, attn))

    assert out.shape == (B, C, W, H)
    assert attn.shape == (B, N, N)
    # gamma == 0 -> residual reproduces x (torch init behaviour); f32 path is exact.
    assert bool(jnp.allclose(out, x, atol=1e-5))
    # attention rows are an exact softmax -> sum to 1 (bf16 storage tolerance).
    assert bool(jnp.allclose(jnp.sum(attn.astype(jnp.float32), axis=-1), 1.0, atol=5e-3))

    # Cross-check against a pure-JAX f32 reference with a non-trivial gamma.
    gamma_half = jnp.asarray([0.5], dtype=jnp.float32)
    out1, attn1 = self_attn_forward(x, wq, bq, wk, bk, wv, bv, gamma_half)
    jax.block_until_ready((out1, attn1))

    def _ref_forward(x, wq, bq, wk, bk, wv, bv, gamma):
        xf = x.reshape(B, C, N)
        q = jnp.einsum('oc,bcn->bon', wq.reshape(C8, C), xf) + bq[None, :, None]
        k = jnp.einsum('oc,bcn->bon', wk.reshape(C8, C), xf) + bk[None, :, None]
        v = jnp.einsum('oc,bcn->bon', wv.reshape(C, C), xf) + bv[None, :, None]
        energy = jnp.einsum('bci,bcj->bij', q, k)
        att = jax.nn.softmax(energy, axis=-1)
        o = jnp.einsum('bcj,bij->bci', v, att)
        return (gamma[0] * o + xf).reshape(B, C, W, H), att

    out_r, attn_r = _ref_forward(x, wq, bq, wk, bk, wv, bv, gamma_half)
    assert bool(jnp.allclose(attn1.astype(jnp.float32), attn_r, atol=1e-2))
    assert bool(jnp.allclose(out1, out_r, atol=1e-3, rtol=1e-3))

    print("KERNEL_OK")
</pallas_src>

<mosaic_0001>
module attributes {stable_mosaic.version = 11 : i64} {
  func.func @_attn_core_kernel(%arg0: i32, %arg1: i32, %arg2: memref<1x64x8xf32, #tpu.memory_space<vmem>>, %arg3: memref<1x8x64xf32, #tpu.memory_space<vmem>>, %arg4: memref<1x32x64xf32, #tpu.memory_space<vmem>>, %arg5: memref<1x32x64xf32, #tpu.memory_space<vmem>>, %arg6: memref<1xf32, #tpu.memory_space<smem>>, %arg7: memref<1x32x64xf32, #tpu.memory_space<vmem>>, %arg8: memref<1x64x64xbf16, #tpu.memory_space<vmem>>) attributes {dimension_semantics = [#tpu.dimension_semantics<parallel>, #tpu.dimension_semantics<parallel>], iteration_bounds = array<i64: 2, 1>, scalar_prefetch = 0 : i64, scratch_operands = 0 : i64, tpu.core_type = #tpu.core_type<tc>, window_params = [{transform_indices = @transform_0, window_bounds = array<i64: 1, 64, 8>}, {transform_indices = @transform_1, window_bounds = array<i64: 1, 8, 64>}, {transform_indices = @transform_2, window_bounds = array<i64: 1, 32, 64>}, {transform_indices = @transform_3, window_bounds = array<i64: 1, 32, 64>}, {transform_indices = @transform_4, window_bounds = array<i64: 1>}, {transform_indices = @transform_5, window_bounds = array<i64: 1, 32, 64>}, {transform_indices = @transform_6, window_bounds = array<i64: 1, 64, 64>}]} {
    %c0 = arith.constant 0 : index
    %c0_0 = arith.constant 0 : index
    %c0_1 = arith.constant 0 : index
    %0 = vector.load %arg2[%c0, %c0_0, %c0_1] : memref<1x64x8xf32, #tpu.memory_space<vmem>>, vector<1x64x8xf32>
    %1 = vector.shape_cast %0 : vector<1x64x8xf32> to vector<64x8xf32>
    %c0_2 = arith.constant 0 : index
    %c0_3 = arith.constant 0 : index
    %c0_4 = arith.constant 0 : index
    %2 = vector.load %arg3[%c0_2, %c0_3, %c0_4] : memref<1x8x64xf32, #tpu.memory_space<vmem>>, vector<1x8x64xf32>
    %3 = vector.shape_cast %2 : vector<1x8x64xf32> to vector<8x64xf32>
    %cst = arith.constant dense<0.000000e+00> : vector<64x64xf32>
    %4 = tpu.matmul %1, %3, %cst {dimension_numbers = #tpu.dot_dimension_numbers<[1], [0], [0], [1], [0, 0, 1, 1], [], []>} : vector<64x8xf32>, vector<8x64xf32>, vector<64x64xf32> -> vector<64x64xf32>
    %cst_5 = arith.constant dense<0xFF800000> : vector<64xf32>
    %5 = vector.multi_reduction <maximumf>, %4, %cst_5 [1] : vector<64x64xf32> to vector<64xf32>
    %6 = vector.shape_cast %5 : vector<64xf32> to vector<64x1xf32>
    %7 = vector.broadcast %6 : vector<64x1xf32> to vector<64x64xf32>
    %8 = arith.subf %4, %7 : vector<64x64xf32>
    %9 = math.exp %8 : vector<64x64xf32>
    %cst_6 = arith.constant dense<0.000000e+00> : vector<64xf32>
    %10 = vector.multi_reduction <add>, %9, %cst_6 [1] : vector<64x64xf32> to vector<64xf32>
    %11 = vector.shape_cast %10 : vector<64xf32> to vector<64x1xf32>
    %12 = vector.broadcast %11 : vector<64x1xf32> to vector<64x64xf32>
    %13 = arith.divf %9, %12 : vector<64x64xf32>
    %14 = arith.truncf %13 : vector<64x64xf32> to vector<64x64xbf16>
    %c0_7 = arith.constant 0 : index
    %c0_8 = arith.constant 0 : index
    %c0_9 = arith.constant 0 : index
    %15 = vector.load %arg8[%c0_7, %c0_8, %c0_9] : memref<1x64x64xbf16, #tpu.memory_space<vmem>>, vector<1x64x64xbf16>
    %16 = vector.shape_cast %15 : vector<1x64x64xbf16> to vector<64x64xbf16>
    %17 = vector.shape_cast %14 : vector<64x64xbf16> to vector<1x64x64xbf16>
    tpu.vector_store %arg8[%c0_7, %c0_8, %c0_9], %17 {strides = array<i32>} : memref<1x64x64xbf16, #tpu.memory_space<vmem>>, vector<1x64x64xbf16>,
    %c0_10 = arith.constant 0 : index
    %c0_11 = arith.constant 0 : index
    %c0_12 = arith.constant 0 : index
    %18 = vector.load %arg4[%c0_10, %c0_11, %c0_12] : memref<1x32x64xf32, #tpu.memory_space<vmem>>, vector<1x32x64xf32>
    %19 = vector.shape_cast %18 : vector<1x32x64xf32> to vector<32x64xf32>
    %cst_13 = arith.constant dense<0.000000e+00> : vector<32x64xf32>
    %20 = tpu.matmul %19, %13, %cst_13 {dimension_numbers = #tpu.dot_dimension_numbers<[1], [1], [0], [0], [0, 0, 1, 0], [], []>} : vector<32x64xf32>, vector<64x64xf32>, vector<32x64xf32> -> vector<32x64xf32>
    %c0_14 = arith.constant 0 : index
    %21 = memref.load %arg6[%c0_14] : memref<1xf32, #tpu.memory_space<smem>>
    %22 = vector.broadcast %21 : f32 to vector<32x64xf32>
    %23 = arith.mulf %22, %20 : vector<32x64xf32>
    %c0_15 = arith.constant 0 : index
    %c0_16 = arith.constant 0 : index
    %c0_17 = arith.constant 0 : index
    %24 = vector.load %arg5[%c0_15, %c0_16, %c0_17] : memref<1x32x64xf32, #tpu.memory_space<vmem>>, vector<1x32x64xf32>
    %25 = vector.shape_cast %24 : vector<1x32x64xf32> to vector<32x64xf32>
    %26 = arith.addf %23, %25 : vector<32x64xf32>
    %c0_18 = arith.constant 0 : index
    %c0_19 = arith.constant 0 : index
    %c0_20 = arith.constant 0 : index
    %27 = vector.load %arg7[%c0_18, %c0_19, %c0_20] : memref<1x32x64xf32, #tpu.memory_space<vmem>>, vector<1x32x64xf32>
    %28 = vector.shape_cast %27 : vector<1x32x64xf32> to vector<32x64xf32>
    %29 = vector.shape_cast %26 : vector<32x64xf32> to vector<1x32x64xf32>
    tpu.vector_store %arg7[%c0_18, %c0_19, %c0_20], %29 {strides = array<i32>} : memref<1x32x64xf32, #tpu.memory_space<vmem>>, vector<1x32x64xf32>,
    return
  }
  func.func @transform_0(%arg0: i32, %arg1: i32) -> (i32, i32, i32) {
    %c0_i32 = arith.constant 0 : i32
    %c0_i32_0 = arith.constant 0 : i32
    return %arg0, %arg1, %c0_i32 : i32, i32, i32
  }
  func.func @transform_1(%arg0: i32, %arg1: i32) -> (i32, i32, i32) {
    %c0_i32 = arith.constant 0 : i32
    %c0_i32_0 = arith.constant 0 : i32
    %c0_i32_1 = arith.constant 0 : i32
    return %arg0, %c0_i32, %c0_i32_0 : i32, i32, i32
  }
  func.func @transform_2(%arg0: i32, %arg1: i32) -> (i32, i32, i32) {
    %c0_i32 = arith.constant 0 : i32
    %c0_i32_0 = arith.constant 0 : i32
    %c0_i32_1 = arith.constant 0 : i32
    return %arg0, %c0_i32, %c0_i32_0 : i32, i32, i32
  }
  func.func @transform_3(%arg0: i32, %arg1: i32) -> (i32, i32, i32) {
    %c0_i32 = arith.constant 0 : i32
    %c0_i32_0 = arith.constant 0 : i32
    return %arg0, %c0_i32, %arg1 : i32, i32, i32
  }
  func.func @transform_4(%arg0: i32, %arg1: i32) -> i32 {
    %c0_i32 = arith.constant 0 : i32
    %c0_i32_0 = arith.constant 0 : i32
    return %c0_i32 : i32
  }
  func.func @transform_5(%arg0: i32, %arg1: i32) -> (i32, i32, i32) {
    %c0_i32 = arith.constant 0 : i32
    %c0_i32_0 = arith.constant 0 : i32
    return %arg0, %c0_i32, %arg1 : i32, i32, i32
  }
  func.func @transform_6(%arg0: i32, %arg1: i32) -> (i32, i32, i32) {
    %c0_i32 = arith.constant 0 : i32
    %c0_i32_0 = arith.constant 0 : i32
    return %arg0, %arg1, %c0_i32 : i32, i32, i32
  }
}

</mosaic_0001>

<llo_original>
// kernel: tpu_custom_call.1
$region0: #{tpu_custom_call.1}
  #allocation0 [shape = 'u32[]', space=smem, size = 0x4, offset = 0x4, fixed_abs, tag = 'smem constant byte address 0x4 - core index']
  #allocation1 [shape = 'u32[72,128]{1,0:T(1,128)}', space=vmem, size = 0x9000, scoped, tag = 'internal scratch']
  #allocation2 [shape = 'f32[1]{0:T(128)S(6)}', space=smem, size = 0x200, scoped, tag = 'scoped memory for tpu_custom_call.1']
  %s0 = inlined_call_operand.vmem [shape: f32[2,64,8], index: 0, kind: input, shape index: {}]
  %s1 = inlined_call_operand.vmem [shape: f32[2,8,64], index: 1, kind: input, shape index: {}]
  %s2 = inlined_call_operand.vmem [shape: f32[2,32,64], index: 2, kind: input, shape index: {}]
  %s3 = inlined_call_operand.vmem [shape: f32[2,32,64], index: 3, kind: input, shape index: {}]
  %s4 = inlined_call_operand.<no memory space> [shape: f32[1], index: 4, kind: input, shape index: {}]
  %s5 = inlined_call_operand.hbm [shape: f32[2,32,64], index: 5, kind: output, shape index: {0}]
  %s6 = inlined_call_operand.hbm [shape: bf16[2,64,64], index: 6, kind: output, shape index: {1}]
  %7 = xla_tuple %s5, %s6
  %s8 = sld [smem:[#allocation0]]
  $region61: #{tpu_custom_call.1} parent=0
    _
  %s10 = ssub.s32 1, %s8
  %s11 = scalar_select 0, %s10, %s8
  %12 = sst [smem:[#allocation2]] %s4
  $region1: #{tpu_custom_call.1} parent=0
    #allocation3 [shape = 'u8[32768]{0}', space=vmem, size = 0x8000, scoped, tag = 'output window, operand 0']
    #allocation4 [shape = 's32[2]{0}', space=sflag, size = 0x8, scoped, tag = 'scoped memory for tpu_custom_call.1']
    #allocation5 [shape = 'u8[32768]{0}', space=vmem, size = 0x8000, scoped, tag = 'output window, operand 1']
    #allocation6 [shape = 's32[2]{0}', space=sflag, size = 0x8, scoped, tag = 'scoped memory for tpu_custom_call.1']
    %13 = vsyncpa [#allocation4], 0
    %s14 = scalar_lea.sflag [#allocation4], 1
    %15 = vsyncpa %s14, 0
    %16 = vsyncpa [#allocation6], 0
    %s17 = scalar_lea.sflag [#allocation6], 1
    %18 = vsyncpa %s17, 0
    loop: start=0, step=1, limit=4
    $region2: #{tpu_custom_call.1} parent=1 // loop_pre_header
      _
    $region3: #{tpu_custom_call.1} parent=1 // loop_header
      %s20 = sphi 0, %s24
      %p21 = scmp.ge.s32.totalorder %s20, 4
      %s27 = sphi 0, %s39
      %s28 = sphi 0, %s35
      %s29 = sphi 0, %s27
      %s30 = sphi 0, %s28
      %s31 = sphi 0, %s29
      %s32 = sphi 0, %s30
      %s44 = sphi 0, %s46
      %s47 = sphi 0, %s44
      %s48 = sphi 0, %s47
      %s64 = sphi 0, %s48
      %s70 = sphi 0, %s72
      %s73 = sphi 0, %s70
      %s74 = sphi 0, %s73
      %s90 = sphi 0, %s74
      %s96 = sphi 0, %s98
      %s99 = sphi 0, %s96
      %s100 = sphi 0, %s99
      %s116 = sphi 0, %s100
      %s124 = sphi 0, %s126
      %s127 = sphi 0, %s124
      %s128 = sphi 0, %s127
      %s144 = sphi 0, %s128
      %s148 = sphi 0, %s148
      %s150 = sphi 0, %s148
      %s151 = sphi 0, %s150
      %s165 = sphi 0, %s151
      %s173 = sphi 0, %s175
      %s176 = sphi 0, %s173
      %s177 = sphi 0, %s176
      %s193 = sphi 0, %s177
      %s201 = sphi 0, %s203
      %s204 = sphi 0, %s201
      %s205 = sphi 0, %s204
      %s221 = sphi 0, %s205
    $region4: #{tpu_custom_call.1} parent=1 // loop_header_branch
      %23 = sbr.rel (%p21) target = $region8
    $region5: #{tpu_custom_call.1} parent=1 // loop_body
      %s25 = ssub.s32 %s20, 1
      %s26 = ssub.s32 %s20, 2
      %s33 = sadd.s32 1, %s28
      %p34 = scmp.ge.s32.totalorder %s33, 1
      %s35 = scalar_select %p34, 0, %s33
      %s36 = sadd.s32 1, %s27
      %s37 = scalar_select %p34, %s36, %s27
      %p38 = scmp.ge.s32.totalorder %s37, 2
      %s39 = scalar_select %p38, 0, %s37
      %s40 = ssub.s32 %s27, %s39
      %s41 = ssub.s32 %s28, %s35
      %s42 = sor.u32 %s40, %s41
      %p43 = scmp.eq.s32.totalorder %s42, 0
      %s45 = sadd.s32 %s44, 1
      %s46 = scalar_select %p43, %s44, %s45
      %p49 = pneg %p43
      %p50 = scmp.eq.s32.totalorder %s20, 1
      %p51 = por %p49, %p50
      %p52 = scmp.ne.s32.totalorder %s44, %s47
      %p53 = scmp.eq.s32.totalorder %s20, 0
      %p54 = por %p52, %p53
      %p55 = scmp.ne.s32.totalorder %s44, %s47
      %p56 = scmp.eq.s32.totalorder %s25, 1
      %p57 = por %p55, %p56
      %p58 = scmp.ne.s32.totalorder %s47, %s48
      %p59 = scmp.eq.s32.totalorder %s25, 0
      %p60 = por %p58, %p59
      %p61 = scmp.ne.s32.totalorder %s47, %s48
      %p62 = scmp.eq.s32.totalorder %s26, 1
      %p63 = por %p61, %p62
      %p65 = scmp.ne.s32.totalorder %s48, %s64
      %p66 = scmp.eq.s32.totalorder %s26, 0
      %p67 = por %p65, %p66
      %s68 = ssub.s32 %s27, %s39
      %p69 = scmp.eq.s32.totalorder %s68, 0
      %s71 = sadd.s32 %s70, 1
      %s72 = scalar_select %p69, %s70, %s71
      %p75 = pneg %p69
      %p76 = scmp.eq.s32.totalorder %s20, 1
      %p77 = por %p75, %p76
      %p78 = scmp.ne.s32.totalorder %s70, %s73
      %p79 = scmp.eq.s32.totalorder %s20, 0
      %p80 = por %p78, %p79
      %p81 = scmp.ne.s32.totalorder %s70, %s73
      %p82 = scmp.eq.s32.totalorder %s25, 1
      %p83 = por %p81, %p82
      %p84 = scmp.ne.s32.totalorder %s73, %s74
      %p85 = scmp.eq.s32.totalorder %s25, 0
      %p86 = por %p84, %p85
      %p87 = scmp.ne.s32.totalorder %s73, %s74
      %p88 = scmp.eq.s32.totalorder %s26, 1
      %p89 = por %p87, %p88
      %p91 = scmp.ne.s32.totalorder %s74, %s90
      %p92 = scmp.eq.s32.totalorder %s26, 0
      %p93 = por %p91, %p92
      %s94 = ssub.s32 %s27, %s39
      %p95 = scmp.eq.s32.totalorder %s94, 0
      %s97 = sadd.s32 %s96, 1
      %s98 = scalar_select %p95, %s96, %s97
      %p101 = pneg %p95
      %p102 = scmp.eq.s32.totalorder %s20, 1
      %p103 = por %p101, %p102
      %p104 = scmp.ne.s32.totalorder %s96, %s99
      %p105 = scmp.eq.s32.totalorder %s20, 0
      %p106 = por %p104, %p105
      %p107 = scmp.ne.s32.totalorder %s96, %s99
      %p108 = scmp.eq.s32.totalorder %s25, 1
      %p109 = por %p107, %p108
      %p110 = scmp.ne.s32.totalorder %s99, %s100
      %p111 = scmp.eq.s32.totalorder %s25, 0
      %p112 = por %p110, %p111
      %p113 = scmp.ne.s32.totalorder %s99, %s100
      %p114 = scmp.eq.s32.totalorder %s26, 1
      %p115 = por %p113, %p114
      %p117 = scmp.ne.s32.totalorder %s100, %s116
      %p118 = scmp.eq.s32.totalorder %s26, 0
      %p119 = por %p117, %p118
      %s120 = ssub.s32 %s27, %s39
      %s121 = ssub.s32 %s28, %s35
      %s122 = sor.u32 %s120, %s121
      %p123 = scmp.eq.s32.totalorder %s122, 0
      %s125 = sadd.s32 %s124, 1
      %s126 = scalar_select %p123, %s124, %s125
      %p129 = pneg %p123
      %p130 = scmp.eq.s32.totalorder %s20, 1
      %p131 = por %p129, %p130
      %p132 = scmp.ne.s32.totalorder %s124, %s127
      %p133 = scmp.eq.s32.totalorder %s20, 0
      %p134 = por %p132, %p133
      %p135 = scmp.ne.s32.totalorder %s124, %s127
      %p136 = scmp.eq.s32.totalorder %s25, 1
      %p137 = por %p135, %p136
      %p138 = scmp.ne.s32.totalorder %s127, %s128
      %p139 = scmp.eq.s32.totalorder %s25, 0
      %p140 = por %p138, %p139
      %p141 = scmp.ne.s32.totalorder %s127, %s128
      %p142 = scmp.eq.s32.totalorder %s26, 1
      %p143 = por %p141, %p142
      %p145 = scmp.ne.s32.totalorder %s128, %s144
      %p146 = scmp.eq.s32.totalorder %s26, 0
      %p147 = por %p145, %p146
      %s149 = sadd.s32 %s148, 1
      %p152 = scmp.eq.s32.totalorder %s20, 1
      %p153 = scmp.ne.s32.totalorder %s148, %s150
      %p154 = scmp.eq.s32.totalorder %s20, 0
      %p155 = por %p153, %p154
      %p156 = scmp.ne.s32.totalorder %s148, %s150
      %p157 = scmp.eq.s32.totalorder %s25, 1
      %p158 = por %p156, %p157
      %p159 = scmp.ne.s32.totalorder %s150, %s151
      %p160 = scmp.eq.s32.totalorder %s25, 0
      %p161 = por %p159, %p160
      %p162 = scmp.ne.s32.totalorder %s150, %s151
      %p163 = scmp.eq.s32.totalorder %s26, 1
      %p164 = por %p162, %p163
      %p166 = scmp.ne.s32.totalorder %s151, %s165
      %p167 = scmp.eq.s32.totalorder %s26, 0
      %p168 = por %p166, %p167
      %s169 = ssub.s32 %s27, %s39
      %s170 = ssub.s32 %s28, %s35
      %s171 = sor.u32 %s169, %s170
      %p172 = scmp.eq.s32.totalorder %s171, 0
      %s174 = sadd.s32 %s173, 1
      %s175 = scalar_select %p172, %s173, %s174
      %p178 = pneg %p172
      %p179 = scmp.eq.s32.totalorder %s20, 1
      %p180 = por %p178, %p179
      %p181 = scmp.ne.s32.totalorder %s173, %s176
      %p182 = scmp.eq.s32.totalorder %s20, 0
      %p183 = por %p181, %p182
      %p184 = scmp.ne.s32.totalorder %s173, %s176
      %p185 = scmp.eq.s32.totalorder %s25, 1
      %p186 = por %p184, %p185
      %p187 = scmp.ne.s32.totalorder %s176, %s177
      %p188 = scmp.eq.s32.totalorder %s25, 0
      %p189 = por %p187, %p188
      %p190 = scmp.ne.s32.totalorder %s176, %s177
      %p191 = scmp.eq.s32.totalorder %s26, 1
      %p192 = por %p190, %p191
      %p194 = scmp.ne.s32.totalorder %s177, %s193
      %p195 = scmp.eq.s32.totalorder %s26, 0
      %p196 = por %p194, %p195
      %s197 = ssub.s32 %s27, %s39
      %s198 = ssub.s32 %s28, %s35
      %s199 = sor.u32 %s197, %s198
      %p200 = scmp.eq.s32.totalorder %s199, 0
      %s202 = sadd.s32 %s201, 1
      %s203 = scalar_select %p200, %s201, %s202
      %p206 = pneg %p200
      %p207 = scmp.eq.s32.totalorder %s20, 1
      %p208 = por %p206, %p207
      %p209 = scmp.ne.s32.totalorder %s201, %s204
      %p210 = scmp.eq.s32.totalorder %s20, 0
      %p211 = por %p209, %p210
      %p212 = scmp.ne.s32.totalorder %s201, %s204
      %p213 = scmp.eq.s32.totalorder %s25, 1
      %p214 = por %p212, %p213
      %p215 = scmp.ne.s32.totalorder %s204, %s205
      %p216 = scmp.eq.s32.totalorder %s25, 0
      %p217 = por %p215, %p216
      %p218 = scmp.ne.s32.totalorder %s204, %s205
      %p219 = scmp.eq.s32.totalorder %s26, 1
      %p220 = por %p218, %p219
      %p222 = scmp.ne.s32.totalorder %s205, %s221
      %p223 = scmp.eq.s32.totalorder %s26, 0
      %p224 = por %p222, %p223
      %p225 = scmp.le.s32.totalorder 1, %s20
      %p226 = scmp.lt.s32.totalorder %s20, 3
      %p227 = pnand %p225, %p226
      %p228 = pneg %p227
      // Predicated region
      $region9: #{tpu_custom_call.1} parent=5 // pred_check
        _
      $region10: #{tpu_custom_call.1} parent=5 // pred_check_branch
        %230 = sbr.rel (%p227) target = $region12
      $region11: #{tpu_custom_call.1} parent=5 // pred_region
        %s231 = ssub.s32 %s20, 1
        // Predicated region
        $region13: #{tpu_custom_call.1} parent=11 // pred_check
          %p232 = pneg %p161
        $region14: #{tpu_custom_call.1} parent=11 // pred_check_branch
          %234 = sbr.rel (%p232) target = $region16
        $region15: #{tpu_custom_call.1} parent=11 // pred_region
          _
        $region16: #{tpu_custom_call.1} parent=11 // pred_fallthru
          _
      $region12: #{tpu_custom_call.1} parent=5 // pred_fallthru
        _
      %p235 = scmp.lt.s32.totalorder %s20, 2
      // Predicated region
      $region17: #{tpu_custom_call.1} parent=5 // pred_check
        %p236 = pneg %p235
      $region18: #{tpu_custom_call.1} parent=5 // pred_check_branch
        %238 = sbr.rel (%p236) target = $region20
      $region19: #{tpu_custom_call.1} parent=5 // pred_region
        // Predicated region
        $region21: #{tpu_custom_call.1} parent=19 // pred_check
          %p239 = pneg %p54
        $region22: #{tpu_custom_call.1} parent=19 // pred_check_branch
          %241 = sbr.rel (%p239) target = $region24
        $region23: #{tpu_custom_call.1} parent=19 // pred_region
          %s242 = smul.u32 8, %s28
          %p243 = scmp.lt.s32.totalorder %s27, 1
          %s244 = scalar_select %p243, %s27, 1
          %p245 = scmp.lt.s32.totalorder %s242, 7
          %s246 = scalar_select %p245, %s242, 7
          %s247 = smul.addr %s244, 8
          %s248 = sadd.s32 %s246, %s247
          %s249 = smul.addr %s248, 8
          %s250 = scalar_lea.vmem %s0, %s249
          %s251 = smul.u32 8, %s28
        $region24: #{tpu_custom_call.1} parent=19 // pred_fallthru
          _
        // Predicated region
        $region25: #{tpu_custom_call.1} parent=19 // pred_check
          %p252 = pneg %p80
        $region26: #{tpu_custom_call.1} parent=19 // pred_check_branch
          %254 = sbr.rel (%p252) target = $region28
        $region27: #{tpu_custom_call.1} parent=19 // pred_region
          %p255 = scmp.lt.s32.totalorder %s27, 1
          %s256 = scalar_select %p255, %s27, 1
          %s257 = smul.addr %s256, 8
          %s258 = scalar_lea.vmem %s1, %s257
        $region28: #{tpu_custom_call.1} parent=19 // pred_fallthru
          _
        // Predicated region
        $region29: #{tpu_custom_call.1} parent=19 // pred_check
          %p259 = pneg %p106
        $region30: #{tpu_custom_call.1} parent=19 // pred_check_branch
          %261 = sbr.rel (%p259) target = $region32
        $region31: #{tpu_custom_call.1} parent=19 // pred_region
          %p262 = scmp.lt.s32.totalorder %s27, 1
          %s263 = scalar_select %p262, %s27, 1
          %s264 = smul.addr %s263, 4
          %s265 = smul.addr %s264, 8
          %s266 = scalar_lea.vmem %s2, %s265
        $region32: #{tpu_custom_call.1} parent=19 // pred_fallthru
          _
        // Predicated region
        $region33: #{tpu_custom_call.1} parent=19 // pred_check
          %p267 = pneg %p134
        $region34: #{tpu_custom_call.1} parent=19 // pred_check_branch
          %269 = sbr.rel (%p267) target = $region36
        $region35: #{tpu_custom_call.1} parent=19 // pred_region
          %p270 = scmp.lt.s32.totalorder %s27, 1
          %s271 = scalar_select %p270, %s27, 1
          %p272 = scmp.lt.s32.totalorder %s28, 0
          %s273 = scalar_select %p272, %s28, 0
          %s274 = smul.addr %s271, 4
          %s275 = sadd.s32 %s273, %s274
          %s276 = smul.addr %s275, 8
          %s277 = scalar_lea.vmem %s3, %s276
        $region36: #{tpu_custom_call.1} parent=19 // pred_fallthru
          _
      $region20: #{tpu_custom_call.1} parent=5 // pred_fallthru
        _
      %p278 = scmp.le.s32.totalorder 1, %s20
      %p279 = scmp.lt.s32.totalorder %s20, 3
      %p280 = pnand %p278, %p279
      %p281 = pneg %p280
      // Predicated region
      $region37: #{tpu_custom_call.1} parent=5 // pred_check
        _
      $region38: #{tpu_custom_call.1} parent=5 // pred_check_branch
        %283 = sbr.rel (%p280) target = $region40
      $region39: #{tpu_custom_call.1} parent=5 // pred_region
        %s284 = ssub.s32 %s20, 1
        %s285 = smul.u32 8, %s30
        %p286 = scmp.lt.s32.totalorder %s29, 1
        %s287 = scalar_select %p286, %s29, 1
        %p288 = scmp.lt.s32.totalorder %s285, 7
        %s289 = scalar_select %p288, %s285, 7
        %s290 = smul.addr %s287, 8
        %s291 = sadd.s32 %s289, %s290
        %s292 = smul.addr %s291, 8
        %s293 = scalar_lea.vmem %s0, %s292
        %p294 = pneg %p60
        %p295 = pneg %p57
        %p296 = scmp.lt.s32.totalorder %s29, 1
        %s297 = scalar_select %p296, %s29, 1
        %s298 = smul.addr %s297, 8
        %s299 = scalar_lea.vmem %s1, %s298
        %p300 = pneg %p86
        %p301 = pneg %p83
        %p302 = scmp.lt.s32.totalorder %s29, 1
        %s303 = scalar_select %p302, %s29, 1
        %s304 = smul.addr %s303, 4
        %s305 = smul.addr %s304, 8
        %s306 = scalar_lea.vmem %s2, %s305
        %p307 = pneg %p112
        %p308 = pneg %p109
        %p309 = scmp.lt.s32.totalorder %s29, 1
        %s310 = scalar_select %p309, %s29, 1
        %p311 = scmp.lt.s32.totalorder %s30, 0
        %s312 = scalar_select %p311, %s30, 0
        %s313 = smul.addr %s310, 4
        %s314 = sadd.s32 %s312, %s313
        %s315 = smul.addr %s314, 8
        %s316 = scalar_lea.vmem %s3, %s315
        %p317 = pneg %p140
        %p318 = pneg %p137
        %p319 = pneg %p161
        %p320 = pneg %p158
        %p321 = pneg %p189
        %p322 = pneg %p186
        %s323 = sand.u32 %s176, 1
        %s324 = scalar_lea.sflag [#allocation4], %s323
        %s325 = sand.u32 %s176, 1
        %s326 = smul.addr %s325, 32
        %s327 = scalar_lea.vmem [#allocation3], %s326
        %p328 = pneg %p217
        %p329 = pneg %p214
        %s330 = sand.u32 %s204, 1
        %s331 = scalar_lea.sflag [#allocation6], %s330
        %s332 = sand.u32 %s204, 1
        %s333 = smul.addr %s332, 32
        %s334 = scalar_lea.vmem [#allocation5], %s333
        %s335 = smul.u32 8, %s30
        %p336 = scmp.lt.s32.totalorder %s29, 1
        %s337 = scalar_select %p336, %s29, 1
        %p338 = scmp.lt.s32.totalorder %s335, 7
        %s339 = scalar_select %p338, %s335, 7
        %s340 = smul.addr %s337, 8
        %s341 = sadd.s32 %s339, %s340
        %s342 = smul.addr %s341, 8
        %s343 = scalar_lea.vmem %s0, %s342
        %s344 = smul.u32 8, %s30
        %p345 = scmp.lt.s32.totalorder %s29, 1
        %s346 = scalar_select %p345, %s29, 1
        %s347 = smul.addr %s346, 8
        %s348 = scalar_lea.vmem %s1, %s347
        %p349 = scmp.lt.s32.totalorder %s29, 1
        %s350 = scalar_select %p349, %s29, 1
        %s351 = smul.addr %s350, 4
        %s352 = smul.addr %s351, 8
        %s353 = scalar_lea.vmem %s2, %s352
        %p354 = scmp.lt.s32.totalorder %s29, 1
        %s355 = scalar_select %p354, %s29, 1
        %p356 = scmp.lt.s32.totalorder %s30, 0
        %s357 = scalar_select %p356, %s30, 0
        %s358 = smul.addr %s355, 4
        %s359 = sadd.s32 %s357, %s358
        %s360 = smul.addr %s359, 8
        %s361 = scalar_lea.vmem %s3, %s360
        %s362 = smul.u32 8, %s30
        %v363 = vld [vmem:[%s343] sm:$0xff]
        %v364 = vld [vmem:[%s343 + $0x8] sm:$0xff]
        %v365 = vld [vmem:[%s343 + $0x10] sm:$0xff]
        %v366 = vld [vmem:[%s343 + $0x18] sm:$0xff]
        %v367 = vld [vmem:[%s343 + $0x20] sm:$0xff]
        %v368 = vld [vmem:[%s343 + $0x28] sm:$0xff]
        %v369 = vld [vmem:[%s343 + $0x30] sm:$0xff]
        %v370 = vld [vmem:[%s343 + $0x38] sm:$0xff]
        %v371 = vld [vmem:[%s348] sm:$0xff]
        %vm372 = vcmask 64512
        %v374 = vsel %vm372, %v363, 0
        %v377 = vsel %vm372, %v364, 0
        %v380 = vsel %vm372, %v365, 0
        %v383 = vsel %vm372, %v366, 0
        %v386 = vsel %vm372, %v367, 0
        %v389 = vsel %vm372, %v368, 0
        %v392 = vsel %vm372, %v369, 0
        %v395 = vsel %vm372, %v370, 0
        %397 = vmatpush.msra.mxu0 0.0
        %398 = vmatpush.msra.mxu0 0.0
        %399 = vmatpush.msra.mxu0 0.0
        %400 = vmatpush.msra.mxu0 0.0
        %401 = vmatpush.msra.mxu0 0.0
        %402 = vmatpush.msra.mxu0 0.0
        %403 = vmatpush.msra.mxu0 0.0
        %404 = vmatpush.msra.mxu0 0.0
        %405 = vmatpush.msra.mxu0 0.0
        %406 = vmatpush.msra.mxu0 0.0
        %407 = vmatpush.msra.mxu0 0.0
        %408 = vmatpush.msra.mxu0 0.0
        %409 = vmatpush.msra.mxu0 0.0
        %410 = vmatpush.msra.mxu0 0.0
        %411 = vmatpush.msra.mxu0 0.0
        %412 = vmatpush.msra.mxu0 %v371
        %413 = vmatmul.f32.gmra.mxu0 %v374
        %v414 = vpop.f32.mrf.mxu0
        %v415 = vadd.f32 0.0, %v414
        %416 = vmatmul.f32.gmra.mxu0 %v377
        %v417 = vpop.f32.mrf.mxu0
        %v418 = vadd.f32 0.0, %v417
        %419 = vmatmul.f32.gmra.mxu0 %v380
        %v420 = vpop.f32.mrf.mxu0
        %v421 = vadd.f32 0.0, %v420
        %422 = vmatmul.f32.gmra.mxu0 %v383
        %v423 = vpop.f32.mrf.mxu0
        %v424 = vadd.f32 0.0, %v423
        %425 = vmatmul.f32.gmra.mxu0 %v386
        %v426 = vpop.f32.mrf.mxu0
        %v427 = vadd.f32 0.0, %v426
        %428 = vmatmul.f32.gmra.mxu0 %v389
        %v429 = vpop.f32.mrf.mxu0
        %v430 = vadd.f32 0.0, %v429
        %431 = vmatmul.f32.gmra.mxu0 %v392
        %v432 = vpop.f32.mrf.mxu0
        %v433 = vadd.f32 0.0, %v432
        %434 = vmatmul.f32.gmra.mxu0 %v395
        %v435 = vpop.f32.mrf.mxu0
        %v436 = vadd.f32 0.0, %v435
        %437 = vdwg.mxu0
        %vm438 = vcmask 523264
        %v439 = vsel %vm438, %v415, -inf
        %440 = vmax.xlane.f32.xlu0 %v439
        %v441 = vpop.xlane.xlu0 %440
        %v442 = vsel %vm438, %v418, -inf
        %443 = vmax.xlane.f32.xlu0 %v442
        %v444 = vpop.xlane.xlu0 %443
        %v445 = vsel %vm438, %v421, -inf
        %446 = vmax.xlane.f32.xlu0 %v445
        %v447 = vpop.xlane.xlu0 %446
        %v448 = vsel %vm438, %v424, -inf
        %449 = vmax.xlane.f32.xlu0 %v448
        %v450 = vpop.xlane.xlu0 %449
        %v451 = vsel %vm438, %v427, -inf
        %452 = vmax.xlane.f32.xlu0 %v451
        %v453 = vpop.xlane.xlu0 %452
        %v454 = vsel %vm438, %v430, -inf
        %455 = vmax.xlane.f32.xlu0 %v454
        %v456 = vpop.xlane.xlu0 %455
        %v457 = vsel %vm438, %v433, -inf
        %458 = vmax.xlane.f32.xlu0 %v457
        %v459 = vpop.xlane.xlu0 %458
        %v460 = vsel %vm438, %v436, -inf
        %461 = vmax.xlane.f32.xlu0 %v460
        %v462 = vpop.xlane.xlu0 %461
        %v463 = vsub.f32 %v415, %v441
        %v464 = vsub.f32 %v418, %v444
        %v465 = vsub.f32 %v421, %v447
        %v466 = vsub.f32 %v424, %v450
        %v467 = vsub.f32 %v427, %v453
        %v468 = vsub.f32 %v430, %v456
        %v469 = vsub.f32 %v433, %v459
        %v470 = vsub.f32 %v436, %v462
        %v471 = vmul.f32 %v463, 1.442695
        %v472 = vpow.pop %v471
        %v473 = vmul.f32 %v464, 1.442695
        %v474 = vpow.pop %v473
        %v475 = vmul.f32 %v465, 1.442695
        %v476 = vpow.pop %v475
        %v477 = vmul.f32 %v466, 1.442695
        %v478 = vpow.pop %v477
        %v479 = vmul.f32 %v467, 1.442695
        %v480 = vpow.pop %v479
        %v481 = vmul.f32 %v468, 1.442695
        %v482 = vpow.pop %v481
        %v483 = vmul.f32 %v469, 1.442695
        %v484 = vpow.pop %v483
        %v485 = vmul.f32 %v470, 1.442695
        %v486 = vpow.pop %v485
        %v487 = vsel %vm438, %v472, 0.0
        %488 = vadd.xlane.f32.xlu0 %v487
        %v489 = vpop.xlane.xlu0 %488
        %v490 = vsel %vm438, %v474, 0.0
        %491 = vadd.xlane.f32.xlu0 %v490
        %v492 = vpop.xlane.xlu0 %491
        %v493 = vsel %vm438, %v476, 0.0
        %494 = vadd.xlane.f32.xlu0 %v493
        %v495 = vpop.xlane.xlu0 %494
        %v496 = vsel %vm438, %v478, 0.0
        %497 = vadd.xlane.f32.xlu0 %v496
        %v498 = vpop.xlane.xlu0 %497
        %v499 = vsel %vm438, %v480, 0.0
        %500 = vadd.xlane.f32.xlu0 %v499
        %v501 = vpop.xlane.xlu0 %500
        %v502 = vsel %vm438, %v482, 0.0
        %503 = vadd.xlane.f32.xlu0 %v502
        %v504 = vpop.xlane.xlu0 %503
        %v505 = vsel %vm438, %v484, 0.0
        %506 = vadd.xlane.f32.xlu0 %v505
        %v507 = vpop.xlane.xlu0 %506
        %v508 = vsel %vm438, %v486, 0.0
        %509 = vadd.xlane.f32.xlu0 %v508
        %v510 = vpop.xlane.xlu0 %509
        %v511 = vrcp.pop %v489
        %v512 = vmul.f32 %v489, %v511
        %v513 = vsub.f32 1.0, %v512
        %v514 = vmul.f32 %v511, %v513
        %v515 = vadd.f32 %v511, %v514
        %vm516 = vweird.f32 %v489
        %vm517 = vweird.f32 %v511
        %vm518 = vmor %vm516, %vm517
        %v519 = vsel %vm518, %v511, %v515
        %v520 = vand.u32 2147483647, %v489
        %vm521 = vcmp.eq.f32.partialorder %v520, 8.507059e+37
        %v522 = vand.u32 %v489, 2147483648
        %v523 = vor.u32 1.1754944e-38, %v522
        %v524 = vsel %vm521, %v523, %v519
        %v525 = vmul.f32 %v472, %v524
        %v526 = vrcp.pop %v492
        %v527 = vmul.f32 %v492, %v526
        %v528 = vsub.f32 1.0, %v527
        %v529 = vmul.f32 %v526, %v528
        %v530 = vadd.f32 %v526, %v529
        %vm531 = vweird.f32 %v492
        %vm532 = vweird.f32 %v526
        %vm533 = vmor %vm531, %vm532
        %v534 = vsel %vm533, %v526, %v530
        %v535 = vand.u32 2147483647, %v492
        %vm536 = vcmp.eq.f32.partialorder %v535, 8.507059e+37
        %v537 = vand.u32 %v492, 2147483648
        %v538 = vor.u32 1.1754944e-38, %v537
        %v539 = vsel %vm536, %v538, %v534
        %v540 = vmul.f32 %v474, %v539
        %v541 = vrcp.pop %v495
        %v542 = vmul.f32 %v495, %v541
        %v543 = vsub.f32 1.0, %v542
        %v544 = vmul.f32 %v541, %v543
        %v545 = vadd.f32 %v541, %v544
        %vm546 = vweird.f32 %v495
        %vm547 = vweird.f32 %v541
        %vm548 = vmor %vm546, %vm547
        %v549 = vsel %vm548, %v541, %v545
        %v550 = vand.u32 2147483647, %v495
        %vm551 = vcmp.eq.f32.partialorder %v550, 8.507059e+37
        %v552 = vand.u32 %v495, 2147483648
        %v553 = vor.u32 1.1754944e-38, %v552
        %v554 = vsel %vm551, %v553, %v549
        %v555 = vmul.f32 %v476, %v554
        %v556 = vrcp.pop %v498
        %v557 = vmul.f32 %v498, %v556
        %v558 = vsub.f32 1.0, %v557
        %v559 = vmul.f32 %v556, %v558
        %v560 = vadd.f32 %v556, %v559
        %vm561 = vweird.f32 %v498
        %vm562 = vweird.f32 %v556
        %vm563 = vmor %vm561, %vm562
        %v564 = vsel %vm563, %v556, %v560
        %v565 = vand.u32 2147483647, %v498
        %vm566 = vcmp.eq.f32.partialorder %v565, 8.507059e+37
        %v567 = vand.u32 %v498, 2147483648
        %v568 = vor.u32 1.1754944e-38, %v567
        %v569 = vsel %vm566, %v568, %v564
        %v570 = vmul.f32 %v478, %v569
        %v571 = vrcp.pop %v501
        %v572 = vmul.f32 %v501, %v571
        %v573 = vsub.f32 1.0, %v572
        %v574 = vmul.f32 %v571, %v573
        %v575 = vadd.f32 %v571, %v574
        %vm576 = vweird.f32 %v501
        %vm577 = vweird.f32 %v571
        %vm578 = vmor %vm576, %vm577
        %v579 = vsel %vm578, %v571, %v575
        %v580 = vand.u32 2147483647, %v501
        %vm581 = vcmp.eq.f32.partialorder %v580, 8.507059e+37
        %v582 = vand.u32 %v501, 2147483648
        %v583 = vor.u32 1.1754944e-38, %v582
        %v584 = vsel %vm581, %v583, %v579
        %v585 = vmul.f32 %v480, %v584
        %v586 = vrcp.pop %v504
        %v587 = vmul.f32 %v504, %v586
        %v588 = vsub.f32 1.0, %v587
        %v589 = vmul.f32 %v586, %v588
        %v590 = vadd.f32 %v586, %v589
        %vm591 = vweird.f32 %v504
        %vm592 = vweird.f32 %v586
        %vm593 = vmor %vm591, %vm592
        %v594 = vsel %vm593, %v586, %v590
        %v595 = vand.u32 2147483647, %v504
        %vm596 = vcmp.eq.f32.partialorder %v595, 8.507059e+37
        %v597 = vand.u32 %v504, 2147483648
        %v598 = vor.u32 1.1754944e-38, %v597
        %v599 = vsel %vm596, %v598, %v594
        %v600 = vmul.f32 %v482, %v599
        %v601 = vrcp.pop %v507
        %v602 = vmul.f32 %v507, %v601
        %v603 = vsub.f32 1.0, %v602
        %v604 = vmul.f32 %v601, %v603
        %v605 = vadd.f32 %v601, %v604
        %vm606 = vweird.f32 %v507
        %vm607 = vweird.f32 %v601
        %vm608 = vmor %vm606, %vm607
        %v609 = vsel %vm608, %v601, %v605
        %v610 = vand.u32 2147483647, %v507
        %vm611 = vcmp.eq.f32.partialorder %v610, 8.507059e+37
        %v612 = vand.u32 %v507, 2147483648
        %v613 = vor.u32 1.1754944e-38, %v612
        %v614 = vsel %vm611, %v613, %v609
        %v615 = vmul.f32 %v484, %v614
        %v616 = vrcp.pop %v510
        %v617 = vmul.f32 %v510, %v616
        %v618 = vsub.f32 1.0, %v617
        %v619 = vmul.f32 %v616, %v618
        %v620 = vadd.f32 %v616, %v619
        %vm621 = vweird.f32 %v510
        %vm622 = vweird.f32 %v616
        %vm623 = vmor %vm621, %vm622
        %v624 = vsel %vm623, %v616, %v620
        %v625 = vand.u32 2147483647, %v510
        %vm626 = vcmp.eq.f32.partialorder %v625, 8.507059e+37
        %v627 = vand.u32 %v510, 2147483648
        %v628 = vor.u32 1.1754944e-38, %v627
        %v629 = vsel %vm626, %v628, %v624
        %v630 = vmul.f32 %v486, %v629
        %v631 = vpack.c.bf16 %v525, %v525
        %v632 = vpack.c.bf16 %v540, %v540
        %v633 = vpack.c.bf16 %v555, %v555
        %v634 = vpack.c.bf16 %v570, %v570
        %v635 = vpack.c.bf16 %v585, %v585
        %v636 = vpack.c.bf16 %v600, %v600
        %v637 = vpack.c.bf16 %v615, %v615
        %v638 = vpack.c.bf16 %v630, %v630
        %vm639 = vcmask 519168
        %640 = vst.msk [vmem:[%s334] sm:$0xf] %vm639, %v631
        %641 = vst.msk [vmem:[%s334 + $0x4] sm:$0xf] %vm639, %v632
        %642 = vst.msk [vmem:[%s334 + $0x8] sm:$0xf] %vm639, %v633
        %643 = vst.msk [vmem:[%s334 + $0xc] sm:$0xf] %vm639, %v634
        %644 = vst.msk [vmem:[%s334 + $0x10] sm:$0xf] %vm639, %v635
        %645 = vst.msk [vmem:[%s334 + $0x14] sm:$0xf] %vm639, %v636
        %646 = vst.msk [vmem:[%s334 + $0x18] sm:$0xf] %vm639, %v637
        %647 = vst.msk [vmem:[%s334 + $0x1c] sm:$0xf] %vm639, %v638
        %v648 = vld [vmem:[%s353] sm:$0xff]
        %v649 = vld [vmem:[%s353 + $0x8] sm:$0xff]
        %v650 = vld [vmem:[%s353 + $0x10] sm:$0xff]
        %v651 = vld [vmem:[%s353 + $0x18] sm:$0xff]
        %v653 = vsel %vm438, %v648, 0
        %v656 = vsel %vm438, %v649, 0
        %v659 = vsel %vm438, %v650, 0
        %v662 = vsel %vm438, %v651, 0
        %v665 = vsel %vm438, %v525, 0
        %v668 = vsel %vm438, %v540, 0
        %v671 = vsel %vm438, %v555, 0
        %v674 = vsel %vm438, %v570, 0
        %v677 = vsel %vm438, %v585, 0
        %v680 = vsel %vm438, %v600, 0
        %v683 = vsel %vm438, %v615, 0
        %v686 = vsel %vm438, %v630, 0
        %688 = vmatpush.xpose.msra.mxu0 0.0
        %689 = vmatpush.xpose.msra.mxu0 0.0
        %690 = vmatpush.xpose.msra.mxu0 0.0
        %691 = vmatpush.xpose.msra.mxu0 0.0
        %692 = vmatpush.xpose.msra.mxu0 0.0
        %693 = vmatpush.xpose.msra.mxu0 0.0
        %694 = vmatpush.xpose.msra.mxu0 0.0
        %695 = vmatpush.xpose.msra.mxu0 0.0
        %696 = vmatpush.xpose.msra.mxu0 %v686
        %697 = vmatpush.xpose.msra.mxu0 %v683
        %698 = vmatpush.xpose.msra.mxu0 %v680
        %699 = vmatpush.xpose.msra.mxu0 %v677
        %700 = vmatpush.xpose.msra.mxu0 %v674
        %701 = vmatpush.xpose.msra.mxu0 %v671
        %702 = vmatpush.xpose.msra.mxu0 %v668
        %703 = vmatpush.xpose.msra.mxu0 %v665
        %704 = vmatmul.f32.gmra.mxu0 %v653
        %v705 = vpop.f32.mrf.mxu0
        %v706 = vadd.f32 0.0, %v705
        %707 = vmatmul.f32.gmra.mxu0 %v656
        %v708 = vpop.f32.mrf.mxu0
        %v709 = vadd.f32 0.0, %v708
        %710 = vmatmul.f32.gmra.mxu0 %v659
        %v711 = vpop.f32.mrf.mxu0
        %v712 = vadd.f32 0.0, %v711
        %713 = vmatmul.f32.gmra.mxu0 %v662
        %v714 = vpop.f32.mrf.mxu0
        %v715 = vadd.f32 0.0, %v714
        %716 = vdwg.mxu0
        %s717 = sld [smem:[#allocation2]]
        %v718 = vstv %s717
        %v719 = vmul.f32 %v718, %v706
        %v720 = vmul.f32 %v718, %v709
        %v721 = vmul.f32 %v718, %v712
        %v722 = vmul.f32 %v718, %v715
        %v723 = vld [vmem:[%s361] sm:$0xff]
        %v724 = vld [vmem:[%s361 + $0x8] sm:$0xff]
        %v725 = vld [vmem:[%s361 + $0x10] sm:$0xff]
        %v726 = vld [vmem:[%s361 + $0x18] sm:$0xff]
        %v727 = vadd.f32 %v719, %v723
        %v728 = vadd.f32 %v720, %v724
        %v729 = vadd.f32 %v721, %v725
        %v730 = vadd.f32 %v722, %v726
        %731 = vst.msk [vmem:[%s327] sm:$0xff] %vm438, %v727
        %732 = vst.msk [vmem:[%s327 + $0x8] sm:$0xff] %vm438, %v728
        %733 = vst.msk [vmem:[%s327 + $0x10] sm:$0xff] %vm438, %v729
        %734 = vst.msk [vmem:[%s327 + $0x18] sm:$0xff] %vm438, %v730
        %s735 = sand.u32 %s176, 1
        %s736 = scalar_lea.sflag [#allocation4], %s735
        %s737 = sand.u32 %s176, 1
        %s738 = smul.addr %s737, 32
        %s739 = scalar_lea.vmem [#allocation3], %s738
        %s740 = sand.u32 %s204, 1
        %s741 = scalar_lea.sflag [#allocation6], %s740
        %s742 = sand.u32 %s204, 1
        %s743 = smul.addr %s742, 32
        %s744 = scalar_lea.vmem [#allocation5], %s743
        // Predicated region
        $region41: #{tpu_custom_call.1} parent=39 // pred_check
          %p745 = pneg %p186
        $region42: #{tpu_custom_call.1} parent=39 // pred_check_branch
          %747 = sbr.rel (%p745) target = $region44
        $region43: #{tpu_custom_call.1} parent=39 // pred_region
          %749 = vsyncadd %s736, 0
          %s750 = smul.addr %s29, 4
          %s751 = sadd.s32 %s30, %s750
          %s752 = smul.addr %s751, 8
          %s753 = scalar_lea.hbm %s5, %s752
          %s754 = sshll.u32 %s739, 4
          %s755 = int_to_ptr.vmem [resolvable:$true] %s754
          %s756 = sshll.u32 %s753, 4
          %s757 = int_to_ptr.hbm [resolvable:$true] %s756
          %762 = dma.vmem_to_hbm [thread:$0]  %s755, 512, %s757, %s736, 128, 128, 8
        $region44: #{tpu_custom_call.1} parent=39 // pred_fallthru
          _
        // Predicated region
        $region45: #{tpu_custom_call.1} parent=39 // pred_check
          %p763 = pneg %p214
        $region46: #{tpu_custom_call.1} parent=39 // pred_check_branch
          %765 = sbr.rel (%p763) target = $region48
        $region47: #{tpu_custom_call.1} parent=39 // pred_region
          %s766 = smul.u32 8, %s30
          %768 = vsyncadd %s741, 0
          %s769 = smul.addr %s29, 8
          %s770 = sadd.s32 %s766, %s769
          %s771 = smul.addr %s770, 4
          %s772 = scalar_lea.hbm %s6, %s771
          %s773 = sshll.u32 %s744, 4
          %s774 = int_to_ptr.vmem [resolvable:$true] %s773
          %s775 = sshll.u32 %s772, 4
          %s776 = int_to_ptr.hbm [resolvable:$true] %s775
          %781 = dma.vmem_to_hbm [thread:$0]  %s774, 512, %s776, %s741, 64, 64, 4
        $region48: #{tpu_custom_call.1} parent=39 // pred_fallthru
          _
      $region40: #{tpu_custom_call.1} parent=5 // pred_fallthru
        _
      %p782 = scmp.le.s32.totalorder 2, %s20
      // Predicated region
      $region49: #{tpu_custom_call.1} parent=5 // pred_check
        %p783 = pneg %p782
      $region50: #{tpu_custom_call.1} parent=5 // pred_check_branch
        %785 = sbr.rel (%p783) target = $region52
      $region51: #{tpu_custom_call.1} parent=5 // pred_region
        %s786 = ssub.s32 %s20, 2
        // Predicated region
        $region53: #{tpu_custom_call.1} parent=51 // pred_check
          %p787 = pneg %p192
        $region54: #{tpu_custom_call.1} parent=51 // pred_check_branch
          %789 = sbr.rel (%p787) target = $region56
        $region55: #{tpu_custom_call.1} parent=51 // pred_region
          %s790 = sand.u32 %s177, 1
          %s791 = scalar_lea.sflag [#allocation4], %s790
          %s792 = sand.u32 %s177, 1
          %s793 = smul.addr %s792, 32
          %s794 = scalar_lea.vmem [#allocation3], %s793
          %796 = dma.done %s791, 512
        $region56: #{tpu_custom_call.1} parent=51 // pred_fallthru
          _
        // Predicated region
        $region57: #{tpu_custom_call.1} parent=51 // pred_check
          %p797 = pneg %p220
        $region58: #{tpu_custom_call.1} parent=51 // pred_check_branch
          %799 = sbr.rel (%p797) target = $region60
        $region59: #{tpu_custom_call.1} parent=51 // pred_region
          %s800 = sand.u32 %s205, 1
          %s801 = scalar_lea.sflag [#allocation6], %s800
          %s802 = sand.u32 %s205, 1
          %s803 = smul.addr %s802, 32
          %s804 = scalar_lea.vmem [#allocation5], %s803
          %806 = dma.done %s801, 512
        $region60: #{tpu_custom_call.1} parent=51 // pred_fallthru
          _
      $region52: #{tpu_custom_call.1} parent=5 // pred_fallthru
        _
    $region6: #{tpu_custom_call.1} parent=1 // loop_footer
      %s24 = sadd.s32 1, %s20
    $region7: #{tpu_custom_call.1} parent=1 // loop_footer_branch
      %19 = sbr.rel target = $region3
    $region8: #{tpu_custom_call.1} parent=1 // loop_exit
      _
    %807 = vsyncpa [#allocation4], 1
    %s808 = scalar_lea.sflag [#allocation4], 1
    %809 = vsyncpa %s808, 1
    %810 = vsyncpa [#allocation6], 1
    %s811 = scalar_lea.sflag [#allocation6], 1
    %812 = vsyncpa %s811, 1

</llo_original>
